<compile_context>
chip_gen: v6e
topology: v6e:2x2x1
jax: 0.10.0
libtpu: 0.0.40
codegen_flags: <defaults>
</compile_context>

<pallas_src>
import inspect

import jax
import jax.numpy as jnp
from jax.experimental import pallas as pl
from jax.experimental.pallas import tpu as pltpu


CPAD = 128  # lane-dense compute width used *inside* the kernel only (VMEM).
            # NOTE: bump to 256 on v6e/v7x once real channel widths approach
            # 128 to fill the 2x256x256 MXU; 128 is a perfect fit on v5e.


def _single_buffer_kwargs():
    """pipeline_mode=pl.Buffered(1) for grid-invariant operands (constant
    index_map => a second pipeline buffer would never be used).  Guarded so
    the kernel still builds on jax versions without the kwarg."""
    try:
        if hasattr(pl, "Buffered") and (
                "pipeline_mode" in inspect.signature(pl.BlockSpec).parameters):
            return {"pipeline_mode": pl.Buffered(1)}
    except (TypeError, ValueError):
        pass
    return {}


def _pick_tile_rows(rows, max_tile=1024, min_tile=256):
    """Prefer large row tiles (amortize ~0.35us/grid-step overhead, ~85% of
    HBM roofline at 512/1024) while keeping >=2 grid steps when the problem
    is big enough so both TensorCores (v7x) get work."""
    t = max_tile
    while t > min_tile and rows < 2 * t:
        t //= 2
    return t


# ----------------------------------------------------------------------------
# Fused kernel: the WHOLE MySequential chain for one row tile.
#   x_ref    : (TM, Cin)           bf16  unpadded activation row tile
#   w_ref    : (L, CPAD, CPAD)     bf16  stacked 1x1 conv weights, BN scale folded in
#   b_ref    : (L, 1, CPAD)        f32   folded-BN bias
#   o_ref    : (TM, Cout)          bf16  final output row tile (real channels only)
#   xpad_ref : (TM, CPAD)          bf16  VMEM scratch: lane-dense padded input
# ----------------------------------------------------------------------------
def _fused_seq_kernel(x_ref, w_ref, b_ref, o_ref, xpad_ref):
    cin = x_ref.shape[1]
    cout = o_ref.shape[1]
    num_layers = w_ref.shape[0]

    # Zero-pad the activation to the lane-dense compute width in VMEM only
    # (the padding never touches HBM).  Re-zeroed every tile so correctness
    # does not depend on how grid steps are sharded across TensorCores.
    xpad_ref[...] = jnp.zeros_like(xpad_ref)
    xpad_ref[:, :cin] = x_ref[...]
    h = xpad_ref[...]                                   # (TM, CPAD) bf16

    # Static unroll: fine for small L.  For long chains, switch to
    # lax.fori_loop(..., unroll=k) with dynamic w_ref[l] to bound live ranges,
    # and (on v7x) stream weights via a trailing 'arbitrary' layer grid axis.
    for l in range(num_layers):
        y = jnp.dot(h, w_ref[l],                        # MXU: bf16 in, f32 accumulation
                    preferred_element_type=jnp.float32)
        y = jnp.clip(y + b_ref[l], 0.0, 6.0)            # folded-BN bias + ReLU6 (f32 epilogue)
        h = y.astype(jnp.bfloat16)

    o_ref[...] = h[:, :cout]                            # only real channels are stored to HBM


def fused_sequential_pw(x2d, w_stack, bias_stack, cout):
    """x2d: (rows, Cin); w_stack: (L, CPAD, CPAD) bf16; bias_stack: (L, 1, CPAD) f32."""
    rows, cin = x2d.shape
    num_layers, cpad, _ = w_stack.shape
    x2d = x2d.astype(jnp.bfloat16)                      # bf16 activation I/O

    tile_rows = _pick_tile_rows(rows)
    grid_m = pl.cdiv(rows, tile_rows)                   # no divisibility assert
    rows_pad = grid_m * tile_rows
    if rows_pad != rows:
        x2d = jnp.pad(x2d, ((0, rows_pad - rows), (0, 0)))

    const_kw = _single_buffer_kwargs()

    flops = 2 * rows_pad * cpad * cpad * num_layers
    bytes_accessed = (rows_pad * (cin + cout) * 2       # bf16 activations in + out (unpadded)
                      + int(w_stack.size) * 2           # resident bf16 weights
                      + int(bias_stack.size) * 4)       # f32 bias

    out = pl.pallas_call(
        _fused_seq_kernel,
        out_shape=jax.ShapeDtypeStruct((rows_pad, cout), jnp.bfloat16),
        grid_spec=pltpu.PrefetchScalarGridSpec(
            num_scalar_prefetch=0,
            grid=(grid_m,),
            in_specs=[
                pl.BlockSpec((tile_rows, cin), lambda i: (i, 0)),
                # Weights stay resident (tiny at these widths).  For deep/wide
                # chains on v7x (64 MiB VMEM) add a trailing 'arbitrary' layer
                # grid axis and stream one (1, CPAD, CPAD) block per step.
                pl.BlockSpec((num_layers, cpad, cpad), lambda i: (0, 0, 0), **const_kw),
                pl.BlockSpec((num_layers, 1, cpad), lambda i: (0, 0, 0), **const_kw),
            ],
            out_specs=pl.BlockSpec((tile_rows, cout), lambda i: (i, 0)),
            scratch_shapes=[pltpu.VMEM((tile_rows, cpad), jnp.bfloat16)],
        ),
        compiler_params=pltpu.CompilerParams(
            dimension_semantics=("parallel",),          # shard row tiles across TCs (v7x)
            vmem_limit_bytes=32 * 1024 * 1024,
        ),
        cost_estimate=pl.CostEstimate(
            flops=flops, transcendentals=0, bytes_accessed=bytes_accessed),
    )(x2d, w_stack, bias_stack)
    return out[:rows]


# ----------------------------------------------------------------------------
# Block module: 1x1 Conv2d + BatchNorm2d (inference, folded) + ReLU6.
# BN scale is folded into the bf16 weight columns; parameters are zero-padded
# to CPAD at construction so padded lanes stay exactly zero through the chain.
# ----------------------------------------------------------------------------
class ConvBNReLU6Block:
    def __init__(self, key, cin, cout, eps=1e-5, cpad=CPAD):
        assert cin <= cpad and cout <= cpad
        kw, kg, kb, km, kv = jax.random.split(key, 5)
        w = jax.random.normal(kw, (cin, cout), jnp.float32) * 0.1
        gamma = 1.0 + 0.1 * jax.random.normal(kg, (cout,), jnp.float32)
        beta = 0.1 * jax.random.normal(kb, (cout,), jnp.float32)
        mean = 0.1 * jax.random.normal(km, (cout,), jnp.float32)
        var = jnp.abs(jax.random.normal(kv, (cout,), jnp.float32)) + 0.5

        s = gamma / jnp.sqrt(var + eps)                 # BN fold: scale & bias
        b = beta - mean * s
        w_folded = w * s[None, :]                       # scale folded into weight columns

        self.cin, self.cout = cin, cout
        self.w_pad = (jnp.zeros((cpad, cpad), jnp.float32)
                      .at[:cin, :cout].set(w_folded)).astype(jnp.bfloat16)
        self.bias_pad = jnp.zeros((1, cpad), jnp.float32).at[:, :cout].set(b[None, :])


# ----------------------------------------------------------------------------
# MySequential: same forward semantics as the PyTorch module (apply contained
# blocks in order), realised as ONE fused pallas_call.
# ----------------------------------------------------------------------------
class MySequential:
    def __init__(self, *modules):
        self.block_list = list(modules)

    def forward(self, x2d):
        w = jnp.stack([m.w_pad for m in self.block_list])
        b = jnp.stack([m.bias_pad for m in self.block_list])
        return fused_sequential_pw(x2d, w, b, cout=self.block_list[-1].cout)

    __call__ = forward


# ----------------------------------------------------------------------------
# NCHW wrapper: one layout change per side.  (If activations are kept NHWC /
# (rows, C)-resident across blocks, call `seq(x2d)` directly and skip both
# transposes entirely.)
# ----------------------------------------------------------------------------
def run_mysequential_nchw(seq, x_nchw):
    n, c, h, w = x_nchw.shape
    cout = seq.block_list[-1].cout
    x2d = jnp.transpose(x_nchw, (0, 2, 3, 1)).reshape(n * h * w, c)
    y2d = seq(x2d)                                      # (rows, cout) bf16
    y = y2d.reshape(n, h, w, cout).transpose(0, 3, 1, 2).astype(jnp.float32)
    return y


def _reference_forward(seq, x_nchw):
    """Pure-JAX f32 reference of the same fused math (for a sanity check)."""
    n, c, h, w = x_nchw.shape
    a = jnp.transpose(x_nchw, (0, 2, 3, 1)).reshape(n * h * w, c)
    for m in seq.block_list:
        wt = m.w_pad[: a.shape[1], : m.cout].astype(jnp.float32)
        a = jnp.clip(a @ wt + m.bias_pad[:, : m.cout], 0.0, 6.0)
    cout = seq.block_list[-1].cout
    return a.reshape(n, h, w, cout).transpose(0, 3, 1, 2)


if __name__ == "__main__":
    key = jax.random.PRNGKey(0)
    kx, k1, k2 = jax.random.split(key, 3)

    # Small shapes consistent with a MobileNet-style block chain.
    N, C, H, W = 2, 4, 16, 16          # rows = 2*16*16 = 512 -> 2 x 256-row parallel tiles
    C_MID, C_OUT = 8, 8

    x = jax.random.normal(kx, (N, C, H, W), jnp.float32)

    seq = MySequential(
        ConvBNReLU6Block(k1, C, C_MID),
        ConvBNReLU6Block(k2, C_MID, C_OUT),
    )

    run = jax.jit(lambda a: run_mysequential_nchw(seq, a))
    y = run(x)
    jax.block_until_ready(y)

    y_ref = _reference_forward(seq, x)
    assert y.shape == (N, C_OUT, H, W)
    assert bool(jnp.all(jnp.isfinite(y)))
    assert bool(jnp.allclose(y, y_ref, atol=1e-1, rtol=1e-1))   # bf16-tolerant check
    print("KERNEL_OK")
</pallas_src>

<mosaic_0001>
module attributes {stable_mosaic.version = 11 : i64} {
  func.func @_fused_seq_kernel(%arg0: i32, %arg1: memref<256x4xbf16, #tpu.memory_space<vmem>>, %arg2: memref<2x128x128xbf16, #tpu.memory_space<vmem>>, %arg3: memref<2x1x128xf32, #tpu.memory_space<vmem>>, %arg4: memref<256x8xbf16, #tpu.memory_space<vmem>>, %arg5: memref<256x128xbf16, #tpu.memory_space<vmem>>) attributes {dimension_semantics = [#tpu.dimension_semantics<parallel>], iteration_bounds = array<i64: 2>, scalar_prefetch = 0 : i64, scratch_operands = 1 : i64, tpu.core_type = #tpu.core_type<tc>, window_params = [{transform_indices = @transform_0, window_bounds = array<i64: 256, 4>}, {pipeline_mode = #tpu.pipeline_mode<synchronous>, transform_indices = @transform_1, window_bounds = array<i64: 2, 128, 128>}, {pipeline_mode = #tpu.pipeline_mode<synchronous>, transform_indices = @transform_2, window_bounds = array<i64: 2, 1, 128>}, {transform_indices = @transform_3, window_bounds = array<i64: 256, 8>}]} {
    %cst = arith.constant 0.000000e+00 : bf16
    %0 = vector.broadcast %cst : bf16 to vector<256x128xbf16>
    %c0 = arith.constant 0 : index
    %c0_0 = arith.constant 0 : index
    %1 = vector.load %arg5[%c0, %c0_0] : memref<256x128xbf16, #tpu.memory_space<vmem>>, vector<256x128xbf16>
    tpu.vector_store %arg5[%c0, %c0_0], %0 {strides = array<i32>} : memref<256x128xbf16, #tpu.memory_space<vmem>>, vector<256x128xbf16>,
    %c0_1 = arith.constant 0 : index
    %c0_2 = arith.constant 0 : index
    %2 = vector.load %arg1[%c0_1, %c0_2] : memref<256x4xbf16, #tpu.memory_space<vmem>>, vector<256x4xbf16>
    %c0_3 = arith.constant 0 : index
    %c0_4 = arith.constant 0 : index
    %3 = vector.load %arg5[%c0_3, %c0_4] : memref<256x128xbf16, #tpu.memory_space<vmem>>, vector<256x4xbf16>
    tpu.vector_store %arg5[%c0_3, %c0_4], %2 {strides = array<i32>} : memref<256x128xbf16, #tpu.memory_space<vmem>>, vector<256x4xbf16>,
    %c0_5 = arith.constant 0 : index
    %c0_6 = arith.constant 0 : index
    %4 = vector.load %arg5[%c0_5, %c0_6] : memref<256x128xbf16, #tpu.memory_space<vmem>>, vector<256x128xbf16>
    %c0_7 = arith.constant 0 : index
    %c0_8 = arith.constant 0 : index
    %c0_9 = arith.constant 0 : index
    %5 = vector.load %arg2[%c0_7, %c0_8, %c0_9] : memref<2x128x128xbf16, #tpu.memory_space<vmem>>, vector<1x128x128xbf16>
    %6 = vector.shape_cast %5 : vector<1x128x128xbf16> to vector<128x128xbf16>
    %cst_10 = arith.constant dense<0.000000e+00> : vector<256x128xf32>
    %7 = tpu.matmul %4, %6, %cst_10 {dimension_numbers = #tpu.dot_dimension_numbers<[1], [0], [0], [1], [0, 0, 1, 1], [], []>} : vector<256x128xbf16>, vector<128x128xbf16>, vector<256x128xf32> -> vector<256x128xf32>
    %c0_11 = arith.constant 0 : index
    %c0_12 = arith.constant 0 : index
    %c0_13 = arith.constant 0 : index
    %8 = vector.load %arg3[%c0_11, %c0_12, %c0_13] : memref<2x1x128xf32, #tpu.memory_space<vmem>>, vector<1x1x128xf32>
    %9 = vector.shape_cast %8 : vector<1x1x128xf32> to vector<1x128xf32>
    %10 = vector.broadcast %9 : vector<1x128xf32> to vector<256x128xf32>
    %11 = arith.addf %7, %10 : vector<256x128xf32>
    %cst_14 = arith.constant 0.000000e+00 : f32
    %cst_15 = arith.constant 6.000000e+00 : f32
    %12 = vector.broadcast %cst_14 : f32 to vector<256x128xf32>
    %13 = arith.maximumf %12, %11 : vector<256x128xf32>
    %14 = vector.broadcast %cst_15 : f32 to vector<256x128xf32>
    %15 = arith.minimumf %14, %13 : vector<256x128xf32>
    %16 = arith.truncf %15 : vector<256x128xf32> to vector<256x128xbf16>
    %c1 = arith.constant 1 : index
    %c0_16 = arith.constant 0 : index
    %c0_17 = arith.constant 0 : index
    %17 = vector.load %arg2[%c1, %c0_16, %c0_17] : memref<2x128x128xbf16, #tpu.memory_space<vmem>>, vector<1x128x128xbf16>
    %18 = vector.shape_cast %17 : vector<1x128x128xbf16> to vector<128x128xbf16>
    %cst_18 = arith.constant dense<0.000000e+00> : vector<256x128xf32>
    %19 = tpu.matmul %16, %18, %cst_18 {dimension_numbers = #tpu.dot_dimension_numbers<[1], [0], [0], [1], [0, 0, 1, 1], [], []>} : vector<256x128xbf16>, vector<128x128xbf16>, vector<256x128xf32> -> vector<256x128xf32>
    %c1_19 = arith.constant 1 : index
    %c0_20 = arith.constant 0 : index
    %c0_21 = arith.constant 0 : index
    %20 = vector.load %arg3[%c1_19, %c0_20, %c0_21] : memref<2x1x128xf32, #tpu.memory_space<vmem>>, vector<1x1x128xf32>
    %21 = vector.shape_cast %20 : vector<1x1x128xf32> to vector<1x128xf32>
    %22 = vector.broadcast %21 : vector<1x128xf32> to vector<256x128xf32>
    %23 = arith.addf %19, %22 : vector<256x128xf32>
    %cst_22 = arith.constant 0.000000e+00 : f32
    %cst_23 = arith.constant 6.000000e+00 : f32
    %24 = vector.broadcast %cst_22 : f32 to vector<256x128xf32>
    %25 = arith.maximumf %24, %23 : vector<256x128xf32>
    %26 = vector.broadcast %cst_23 : f32 to vector<256x128xf32>
    %27 = arith.minimumf %26, %25 : vector<256x128xf32>
    %28 = arith.truncf %27 : vector<256x128xf32> to vector<256x128xbf16>
    %29 = vector.extract_strided_slice %28 {offsets = [0, 0], sizes = [256, 8], strides = [1, 1]} : vector<256x128xbf16> to vector<256x8xbf16>
    %c0_24 = arith.constant 0 : index
    %c0_25 = arith.constant 0 : index
    %30 = vector.load %arg4[%c0_24, %c0_25] : memref<256x8xbf16, #tpu.memory_space<vmem>>, vector<256x8xbf16>
    tpu.vector_store %arg4[%c0_24, %c0_25], %29 {strides = array<i32>} : memref<256x8xbf16, #tpu.memory_space<vmem>>, vector<256x8xbf16>,
    return
  }
  func.func @transform_0(%arg0: i32) -> (i32, i32) {
    %c0_i32 = arith.constant 0 : i32
    %c0_i32_0 = arith.constant 0 : i32
    return %arg0, %c0_i32 : i32, i32
  }
  func.func @transform_1(%arg0: i32) -> (i32, i32, i32) {
    %c0_i32 = arith.constant 0 : i32
    %c0_i32_0 = arith.constant 0 : i32
    %c0_i32_1 = arith.constant 0 : i32
    %c0_i32_2 = arith.constant 0 : i32
    return %c0_i32, %c0_i32_0, %c0_i32_1 : i32, i32, i32
  }
  func.func @transform_2(%arg0: i32) -> (i32, i32, i32) {
    %c0_i32 = arith.constant 0 : i32
    %c0_i32_0 = arith.constant 0 : i32
    %c0_i32_1 = arith.constant 0 : i32
    %c0_i32_2 = arith.constant 0 : i32
    return %c0_i32, %c0_i32_0, %c0_i32_1 : i32, i32, i32
  }
  func.func @transform_3(%arg0: i32) -> (i32, i32) {
    %c0_i32 = arith.constant 0 : i32
    %c0_i32_0 = arith.constant 0 : i32
    return %arg0, %c0_i32 : i32, i32
  }
}

</mosaic_0001>

<llo_original>
// kernel: _lambda_.1
$region0: #{_lambda_.1}
  #allocation0 [shape = 'u32[]', space=smem, size = 0x4, offset = 0x4, fixed_abs, tag = 'smem constant byte address 0x4 - core index']
  #allocation1 [shape = 'u32[144,128]{1,0:T(1,128)}', space=vmem, size = 0x12000, scoped, tag = 'internal scratch']
  #allocation2 [shape = 'bf16[256,128]{1,0:T(8,128)(2,1)}', space=vmem, size = 0x10000, scoped, tag = 'scratch operand']
  %s0 = inlined_call_operand.vmem [shape: bf16[512,4], index: 0, kind: input, shape index: {}]
  %s1 = inlined_call_operand.vmem [shape: bf16[2,128,128], index: 1, kind: input, shape index: {}]
  %s2 = inlined_call_operand.vmem [shape: f32[2,1,128], index: 2, kind: input, shape index: {}]
  %s3 = inlined_call_operand.vmem [shape: bf16[512,8], index: 3, kind: output, shape index: {}]
  %s4 = sld [smem:[#allocation0]]
  $region45: #{_lambda_.1} parent=0
    _
  %s6 = ssub.s32 1, %s4
  %s7 = scalar_select 0, %s6, %s4
  loop: start=0, step=1, limit=4
  $region2: #{_lambda_.1} parent=0 // loop_pre_header
    _
  $region3: #{_lambda_.1} parent=0 // loop_header
    %s9 = sphi 0, %s13
    %p10 = scmp.ge.s32.totalorder %s9, 4
    %s19 = sphi 0, %s21
    %s22 = sphi 0, %s19
    %s23 = sphi 0, %s22
    %s39 = sphi 0, %s23
    %s43 = sphi 0, %s43
    %s45 = sphi 0, %s43
    %s46 = sphi 0, %s45
    %s60 = sphi 0, %s46
    %s64 = sphi 0, %s64
    %s66 = sphi 0, %s64
    %s67 = sphi 0, %s66
    %s81 = sphi 0, %s67
    %s87 = sphi 0, %s89
    %s90 = sphi 0, %s87
    %s91 = sphi 0, %s90
    %s107 = sphi 0, %s91
  $region4: #{_lambda_.1} parent=0 // loop_header_branch
    %12 = sbr.rel (%p10) target = $region8
  $region5: #{_lambda_.1} parent=0 // loop_body
    %s14 = ssub.s32 %s9, 1
    %s15 = ssub.s32 %s9, 2
    %s16 = sadd.s32 %s9, 1
    %s17 = ssub.s32 %s9, %s16
    %p18 = scmp.eq.s32.totalorder %s17, 0
    %s20 = sadd.s32 %s19, 1
    %s21 = scalar_select %p18, %s19, %s20
    %p24 = pneg %p18
    %p25 = scmp.eq.s32.totalorder %s9, 1
    %p26 = por %p24, %p25
    %p27 = scmp.ne.s32.totalorder %s19, %s22
    %p28 = scmp.eq.s32.totalorder %s9, 0
    %p29 = por %p27, %p28
    %p30 = scmp.ne.s32.totalorder %s19, %s22
    %p31 = scmp.eq.s32.totalorder %s14, 1
    %p32 = por %p30, %p31
    %p33 = scmp.ne.s32.totalorder %s22, %s23
    %p34 = scmp.eq.s32.totalorder %s14, 0
    %p35 = por %p33, %p34
    %p36 = scmp.ne.s32.totalorder %s22, %s23
    %p37 = scmp.eq.s32.totalorder %s15, 1
    %p38 = por %p36, %p37
    %p40 = scmp.ne.s32.totalorder %s23, %s39
    %p41 = scmp.eq.s32.totalorder %s15, 0
    %p42 = por %p40, %p41
    %s44 = sadd.s32 %s43, 1
    %p47 = scmp.eq.s32.totalorder %s9, 1
    %p48 = scmp.ne.s32.totalorder %s43, %s45
    %p49 = scmp.eq.s32.totalorder %s9, 0
    %p50 = por %p48, %p49
    %p51 = scmp.ne.s32.totalorder %s43, %s45
    %p52 = scmp.eq.s32.totalorder %s14, 1
    %p53 = por %p51, %p52
    %p54 = scmp.ne.s32.totalorder %s45, %s46
    %p55 = scmp.eq.s32.totalorder %s14, 0
    %p56 = por %p54, %p55
    %p57 = scmp.ne.s32.totalorder %s45, %s46
    %p58 = scmp.eq.s32.totalorder %s15, 1
    %p59 = por %p57, %p58
    %p61 = scmp.ne.s32.totalorder %s46, %s60
    %p62 = scmp.eq.s32.totalorder %s15, 0
    %p63 = por %p61, %p62
    %s65 = sadd.s32 %s64, 1
    %p68 = scmp.eq.s32.totalorder %s9, 1
    %p69 = scmp.ne.s32.totalorder %s64, %s66
    %p70 = scmp.eq.s32.totalorder %s9, 0
    %p71 = por %p69, %p70
    %p72 = scmp.ne.s32.totalorder %s64, %s66
    %p73 = scmp.eq.s32.totalorder %s14, 1
    %p74 = por %p72, %p73
    %p75 = scmp.ne.s32.totalorder %s66, %s67
    %p76 = scmp.eq.s32.totalorder %s14, 0
    %p77 = por %p75, %p76
    %p78 = scmp.ne.s32.totalorder %s66, %s67
    %p79 = scmp.eq.s32.totalorder %s15, 1
    %p80 = por %p78, %p79
    %p82 = scmp.ne.s32.totalorder %s67, %s81
    %p83 = scmp.eq.s32.totalorder %s15, 0
    %p84 = por %p82, %p83
    %s85 = ssub.s32 %s9, %s16
    %p86 = scmp.eq.s32.totalorder %s85, 0
    %s88 = sadd.s32 %s87, 1
    %s89 = scalar_select %p86, %s87, %s88
    %p92 = pneg %p86
    %p93 = scmp.eq.s32.totalorder %s9, 1
    %p94 = por %p92, %p93
    %p95 = scmp.ne.s32.totalorder %s87, %s90
    %p96 = scmp.eq.s32.totalorder %s9, 0
    %p97 = por %p95, %p96
    %p98 = scmp.ne.s32.totalorder %s87, %s90
    %p99 = scmp.eq.s32.totalorder %s14, 1
    %p100 = por %p98, %p99
    %p101 = scmp.ne.s32.totalorder %s90, %s91
    %p102 = scmp.eq.s32.totalorder %s14, 0
    %p103 = por %p101, %p102
    %p104 = scmp.ne.s32.totalorder %s90, %s91
    %p105 = scmp.eq.s32.totalorder %s15, 1
    %p106 = por %p104, %p105
    %p108 = scmp.ne.s32.totalorder %s91, %s107
    %p109 = scmp.eq.s32.totalorder %s15, 0
    %p110 = por %p108, %p109
    %p111 = scmp.le.s32.totalorder 1, %s9
    %p112 = scmp.lt.s32.totalorder %s9, 3
    %p113 = pnand %p111, %p112
    %p114 = pneg %p113
    // Predicated region
    $region9: #{_lambda_.1} parent=5 // pred_check
      _
    $region10: #{_lambda_.1} parent=5 // pred_check_branch
      %116 = sbr.rel (%p113) target = $region12
    $region11: #{_lambda_.1} parent=5 // pred_region
      %s117 = ssub.s32 %s9, 1
      // Predicated region
      $region13: #{_lambda_.1} parent=11 // pred_check
        %p118 = pneg %p56
      $region14: #{_lambda_.1} parent=11 // pred_check_branch
        %120 = sbr.rel (%p118) target = $region16
      $region15: #{_lambda_.1} parent=11 // pred_region
        _
      $region16: #{_lambda_.1} parent=11 // pred_fallthru
        _
      // Predicated region
      $region17: #{_lambda_.1} parent=11 // pred_check
        %p121 = pneg %p77
      $region18: #{_lambda_.1} parent=11 // pred_check_branch
        %123 = sbr.rel (%p121) target = $region20
      $region19: #{_lambda_.1} parent=11 // pred_region
        _
      $region20: #{_lambda_.1} parent=11 // pred_fallthru
        _
    $region12: #{_lambda_.1} parent=5 // pred_fallthru
      _
    %p124 = scmp.lt.s32.totalorder %s9, 2
    // Predicated region
    $region21: #{_lambda_.1} parent=5 // pred_check
      %p125 = pneg %p124
    $region22: #{_lambda_.1} parent=5 // pred_check_branch
      %127 = sbr.rel (%p125) target = $region24
    $region23: #{_lambda_.1} parent=5 // pred_region
      // Predicated region
      $region25: #{_lambda_.1} parent=23 // pred_check
        %p128 = pneg %p29
      $region26: #{_lambda_.1} parent=23 // pred_check_branch
        %130 = sbr.rel (%p128) target = $region28
      $region27: #{_lambda_.1} parent=23 // pred_region
        %s131 = smul.u32 32, %s9
        %p132 = scmp.lt.s32.totalorder %s131, 63
        %s133 = scalar_select %p132, %s131, 63
        %s134 = smul.addr %s133, 4
        %s135 = scalar_lea.vmem %s0, %s134
        %s136 = smul.u32 32, %s9
      $region28: #{_lambda_.1} parent=23 // pred_fallthru
        _
    $region24: #{_lambda_.1} parent=5 // pred_fallthru
      _
    %p137 = scmp.le.s32.totalorder 1, %s9
    %p138 = scmp.lt.s32.totalorder %s9, 3
    %p139 = pnand %p137, %p138
    %p140 = pneg %p139
    // Predicated region
    $region29: #{_lambda_.1} parent=5 // pred_check
      _
    $region30: #{_lambda_.1} parent=5 // pred_check_branch
      %142 = sbr.rel (%p139) target = $region32
    $region31: #{_lambda_.1} parent=5 // pred_region
      %s143 = ssub.s32 %s9, 1
      %s144 = smul.u32 32, %s14
      %p145 = scmp.lt.s32.totalorder %s144, 63
      %s146 = scalar_select %p145, %s144, 63
      %s147 = smul.addr %s146, 4
      %s148 = scalar_lea.vmem %s0, %s147
      %p149 = pneg %p35
      %p150 = pneg %p32
      %p151 = pneg %p56
      %p152 = pneg %p53
      %p153 = pneg %p77
      %p154 = pneg %p74
      %p155 = pneg %p103
      %p156 = pneg %p100
      %s157 = smul.u32 32, %s14
      %p158 = scmp.lt.s32.totalorder %s157, 63
      %s159 = scalar_select %p158, %s157, 63
      %s160 = smul.addr %s159, 4
      %s161 = scalar_lea.vmem %s3, %s160
      %s162 = smul.u32 32, %s14
      %p163 = scmp.lt.s32.totalorder %s162, 63
      %s164 = scalar_select %p163, %s162, 63
      %s165 = smul.addr %s164, 4
      %s166 = scalar_lea.vmem %s0, %s165
      %s167 = smul.u32 32, %s14
      %s168 = smul.u32 32, %s14
      %p169 = scmp.lt.s32.totalorder %s168, 63
      %s170 = scalar_select %p169, %s168, 63
      %s171 = smul.addr %s170, 4
      %s172 = scalar_lea.vmem %s3, %s171
      %s173 = smul.u32 32, %s14
      %175 = vst [vmem:[#allocation2] sm:$0xf] 0
      %176 = vst [vmem:[#allocation2 + $0x4] sm:$0xf] 0
      %177 = vst [vmem:[#allocation2 + $0x8] sm:$0xf] 0
      %178 = vst [vmem:[#allocation2 + $0xc] sm:$0xf] 0
      %179 = vst [vmem:[#allocation2 + $0x10] sm:$0xf] 0
      %180 = vst [vmem:[#allocation2 + $0x14] sm:$0xf] 0
      %181 = vst [vmem:[#allocation2 + $0x18] sm:$0xf] 0
      %182 = vst [vmem:[#allocation2 + $0x1c] sm:$0xf] 0
      %183 = vst [vmem:[#allocation2 + $0x20] sm:$0xf] 0
      %184 = vst [vmem:[#allocation2 + $0x24] sm:$0xf] 0
      %185 = vst [vmem:[#allocation2 + $0x28] sm:$0xf] 0
      %186 = vst [vmem:[#allocation2 + $0x2c] sm:$0xf] 0
      %187 = vst [vmem:[#allocation2 + $0x30] sm:$0xf] 0
      %188 = vst [vmem:[#allocation2 + $0x34] sm:$0xf] 0
      %189 = vst [vmem:[#allocation2 + $0x38] sm:$0xf] 0
      %190 = vst [vmem:[#allocation2 + $0x3c] sm:$0xf] 0
      %191 = vst [vmem:[#allocation2 + $0x40] sm:$0xf] 0
      %192 = vst [vmem:[#allocation2 + $0x44] sm:$0xf] 0
      %193 = vst [vmem:[#allocation2 + $0x48] sm:$0xf] 0
      %194 = vst [vmem:[#allocation2 + $0x4c] sm:$0xf] 0
      %195 = vst [vmem:[#allocation2 + $0x50] sm:$0xf] 0
      %196 = vst [vmem:[#allocation2 + $0x54] sm:$0xf] 0
      %197 = vst [vmem:[#allocation2 + $0x58] sm:$0xf] 0
      %198 = vst [vmem:[#allocation2 + $0x5c] sm:$0xf] 0
      %199 = vst [vmem:[#allocation2 + $0x60] sm:$0xf] 0
      %200 = vst [vmem:[#allocation2 + $0x64] sm:$0xf] 0
      %201 = vst [vmem:[#allocation2 + $0x68] sm:$0xf] 0
      %202 = vst [vmem:[#allocation2 + $0x6c] sm:$0xf] 0
      %203 = vst [vmem:[#allocation2 + $0x70] sm:$0xf] 0
      %204 = vst [vmem:[#allocation2 + $0x74] sm:$0xf] 0
      %205 = vst [vmem:[#allocation2 + $0x78] sm:$0xf] 0
      %206 = vst [vmem:[#allocation2 + $0x7c] sm:$0xf] 0
      %v207 = vld [vmem:[%s166] sm:$0xf]
      %v208 = vld [vmem:[%s166 + $0x4] sm:$0xf]
      %v209 = vld [vmem:[%s166 + $0x8] sm:$0xf]
      %v210 = vld [vmem:[%s166 + $0xc] sm:$0xf]
      %v211 = vld [vmem:[%s166 + $0x10] sm:$0xf]
      %v212 = vld [vmem:[%s166 + $0x14] sm:$0xf]
      %v213 = vld [vmem:[%s166 + $0x18] sm:$0xf]
      %v214 = vld [vmem:[%s166 + $0x1c] sm:$0xf]
      %v215 = vld [vmem:[%s166 + $0x20] sm:$0xf]
      %v216 = vld [vmem:[%s166 + $0x24] sm:$0xf]
      %v217 = vld [vmem:[%s166 + $0x28] sm:$0xf]
      %v218 = vld [vmem:[%s166 + $0x2c] sm:$0xf]
      %v219 = vld [vmem:[%s166 + $0x30] sm:$0xf]
      %v220 = vld [vmem:[%s166 + $0x34] sm:$0xf]
      %v221 = vld [vmem:[%s166 + $0x38] sm:$0xf]
      %v222 = vld [vmem:[%s166 + $0x3c] sm:$0xf]
      %v223 = vld [vmem:[%s166 + $0x40] sm:$0xf]
      %v224 = vld [vmem:[%s166 + $0x44] sm:$0xf]
      %v225 = vld [vmem:[%s166 + $0x48] sm:$0xf]
      %v226 = vld [vmem:[%s166 + $0x4c] sm:$0xf]
      %v227 = vld [vmem:[%s166 + $0x50] sm:$0xf]
      %v228 = vld [vmem:[%s166 + $0x54] sm:$0xf]
      %v229 = vld [vmem:[%s166 + $0x58] sm:$0xf]
      %v230 = vld [vmem:[%s166 + $0x5c] sm:$0xf]
      %v231 = vld [vmem:[%s166 + $0x60] sm:$0xf]
      %v232 = vld [vmem:[%s166 + $0x64] sm:$0xf]
      %v233 = vld [vmem:[%s166 + $0x68] sm:$0xf]
      %v234 = vld [vmem:[%s166 + $0x6c] sm:$0xf]
      %v235 = vld [vmem:[%s166 + $0x70] sm:$0xf]
      %v236 = vld [vmem:[%s166 + $0x74] sm:$0xf]
      %v237 = vld [vmem:[%s166 + $0x78] sm:$0xf]
      %v238 = vld [vmem:[%s166 + $0x7c] sm:$0xf]
      %vm239 = vcmask 27648
      %240 = vst.msk [vmem:[#allocation2] sm:$0xf] %vm239, %v207
      %241 = vst.msk [vmem:[#allocation2 + $0x4] sm:$0xf] %vm239, %v208
      %242 = vst.msk [vmem:[#allocation2 + $0x8] sm:$0xf] %vm239, %v209
      %243 = vst.msk [vmem:[#allocation2 + $0xc] sm:$0xf] %vm239, %v210
      %244 = vst.msk [vmem:[#allocation2 + $0x10] sm:$0xf] %vm239, %v211
      %245 = vst.msk [vmem:[#allocation2 + $0x14] sm:$0xf] %vm239, %v212
      %246 = vst.msk [vmem:[#allocation2 + $0x18] sm:$0xf] %vm239, %v213
      %247 = vst.msk [vmem:[#allocation2 + $0x1c] sm:$0xf] %vm239, %v214
      %248 = vst.msk [vmem:[#allocation2 + $0x20] sm:$0xf] %vm239, %v215
      %249 = vst.msk [vmem:[#allocation2 + $0x24] sm:$0xf] %vm239, %v216
      %250 = vst.msk [vmem:[#allocation2 + $0x28] sm:$0xf] %vm239, %v217
      %251 = vst.msk [vmem:[#allocation2 + $0x2c] sm:$0xf] %vm239, %v218
      %252 = vst.msk [vmem:[#allocation2 + $0x30] sm:$0xf] %vm239, %v219
      %253 = vst.msk [vmem:[#allocation2 + $0x34] sm:$0xf] %vm239, %v220
      %254 = vst.msk [vmem:[#allocation2 + $0x38] sm:$0xf] %vm239, %v221
      %255 = vst.msk [vmem:[#allocation2 + $0x3c] sm:$0xf] %vm239, %v222
      %256 = vst.msk [vmem:[#allocation2 + $0x40] sm:$0xf] %vm239, %v223
      %257 = vst.msk [vmem:[#allocation2 + $0x44] sm:$0xf] %vm239, %v224
      %258 = vst.msk [vmem:[#allocation2 + $0x48] sm:$0xf] %vm239, %v225
      %259 = vst.msk [vmem:[#allocation2 + $0x4c] sm:$0xf] %vm239, %v226
      %260 = vst.msk [vmem:[#allocation2 + $0x50] sm:$0xf] %vm239, %v227
      %261 = vst.msk [vmem:[#allocation2 + $0x54] sm:$0xf] %vm239, %v228
      %262 = vst.msk [vmem:[#allocation2 + $0x58] sm:$0xf] %vm239, %v229
      %263 = vst.msk [vmem:[#allocation2 + $0x5c] sm:$0xf] %vm239, %v230
      %264 = vst.msk [vmem:[#allocation2 + $0x60] sm:$0xf] %vm239, %v231
      %265 = vst.msk [vmem:[#allocation2 + $0x64] sm:$0xf] %vm239, %v232
      %266 = vst.msk [vmem:[#allocation2 + $0x68] sm:$0xf] %vm239, %v233
      %267 = vst.msk [vmem:[#allocation2 + $0x6c] sm:$0xf] %vm239, %v234
      %268 = vst.msk [vmem:[#allocation2 + $0x70] sm:$0xf] %vm239, %v235
      %269 = vst.msk [vmem:[#allocation2 + $0x74] sm:$0xf] %vm239, %v236
      %270 = vst.msk [vmem:[#allocation2 + $0x78] sm:$0xf] %vm239, %v237
      %271 = vst.msk [vmem:[#allocation2 + $0x7c] sm:$0xf] %vm239, %v238
      %v272 = vld [vmem:[#allocation2] sm:$0xf]
      %v273 = vld [vmem:[#allocation2 + $0x4] sm:$0xf]
      %v274 = vld [vmem:[#allocation2 + $0x8] sm:$0xf]
      %v275 = vld [vmem:[#allocation2 + $0xc] sm:$0xf]
      %v276 = vld [vmem:[#allocation2 + $0x10] sm:$0xf]
      %v277 = vld [vmem:[#allocation2 + $0x14] sm:$0xf]
      %v278 = vld [vmem:[#allocation2 + $0x18] sm:$0xf]
      %v279 = vld [vmem:[#allocation2 + $0x1c] sm:$0xf]
      %v280 = vld [vmem:[#allocation2 + $0x20] sm:$0xf]
      %v281 = vld [vmem:[#allocation2 + $0x24] sm:$0xf]
      %v282 = vld [vmem:[#allocation2 + $0x28] sm:$0xf]
      %v283 = vld [vmem:[#allocation2 + $0x2c] sm:$0xf]
      %v284 = vld [vmem:[#allocation2 + $0x30] sm:$0xf]
      %v285 = vld [vmem:[#allocation2 + $0x34] sm:$0xf]
      %v286 = vld [vmem:[#allocation2 + $0x38] sm:$0xf]
      %v287 = vld [vmem:[#allocation2 + $0x3c] sm:$0xf]
      %v288 = vld [vmem:[#allocation2 + $0x40] sm:$0xf]
      %v289 = vld [vmem:[#allocation2 + $0x44] sm:$0xf]
      %v290 = vld [vmem:[#allocation2 + $0x48] sm:$0xf]
      %v291 = vld [vmem:[#allocation2 + $0x4c] sm:$0xf]
      %v292 = vld [vmem:[#allocation2 + $0x50] sm:$0xf]
      %v293 = vld [vmem:[#allocation2 + $0x54] sm:$0xf]
      %v294 = vld [vmem:[#allocation2 + $0x58] sm:$0xf]
      %v295 = vld [vmem:[#allocation2 + $0x5c] sm:$0xf]
      %v296 = vld [vmem:[#allocation2 + $0x60] sm:$0xf]
      %v297 = vld [vmem:[#allocation2 + $0x64] sm:$0xf]
      %v298 = vld [vmem:[#allocation2 + $0x68] sm:$0xf]
      %v299 = vld [vmem:[#allocation2 + $0x6c] sm:$0xf]
      %v300 = vld [vmem:[#allocation2 + $0x70] sm:$0xf]
      %v301 = vld [vmem:[#allocation2 + $0x74] sm:$0xf]
      %v302 = vld [vmem:[#allocation2 + $0x78] sm:$0xf]
      %v303 = vld [vmem:[#allocation2 + $0x7c] sm:$0xf]
      %v304 = vld [vmem:[%s1] sm:$0xf]
      %v305 = vld [vmem:[%s1 + $0x4] sm:$0xf]
      %v306 = vld [vmem:[%s1 + $0x8] sm:$0xf]
      %v307 = vld [vmem:[%s1 + $0xc] sm:$0xf]
      %v308 = vld [vmem:[%s1 + $0x10] sm:$0xf]
      %v309 = vld [vmem:[%s1 + $0x14] sm:$0xf]
      %v310 = vld [vmem:[%s1 + $0x18] sm:$0xf]
      %v311 = vld [vmem:[%s1 + $0x1c] sm:$0xf]
      %v312 = vld [vmem:[%s1 + $0x20] sm:$0xf]
      %v313 = vld [vmem:[%s1 + $0x24] sm:$0xf]
      %v314 = vld [vmem:[%s1 + $0x28] sm:$0xf]
      %v315 = vld [vmem:[%s1 + $0x2c] sm:$0xf]
      %v316 = vld [vmem:[%s1 + $0x30] sm:$0xf]
      %v317 = vld [vmem:[%s1 + $0x34] sm:$0xf]
      %v318 = vld [vmem:[%s1 + $0x38] sm:$0xf]
      %v319 = vld [vmem:[%s1 + $0x3c] sm:$0xf]
      %v320 = vld [vmem:[%s2] sm:$0x1]
      %v322 = vlaneseq
      %v323 = vshrl.u32 %v322, 7
      %v324 = vsub.s32 0, %v323
      %v325 = vrot.slane %v320, %v324
      %v359 = vunpack.c.l.b16 %v272
      %v360 = vunpack.c.l.b16 %v273
      %v361 = vunpack.c.l.b16 %v274
      %v362 = vunpack.c.l.b16 %v275
      %v363 = vunpack.c.l.b16 %v276
      %v364 = vunpack.c.l.b16 %v277
      %v365 = vunpack.c.l.b16 %v278
      %v366 = vunpack.c.l.b16 %v279
      %v367 = vunpack.c.l.b16 %v280
      %v368 = vunpack.c.l.b16 %v281
      %v369 = vunpack.c.l.b16 %v282
      %v370 = vunpack.c.l.b16 %v283
      %v371 = vunpack.c.l.b16 %v284
      %v372 = vunpack.c.l.b16 %v285
      %v373 = vunpack.c.l.b16 %v286
      %v374 = vunpack.c.l.b16 %v287
      %v375 = vunpack.c.l.b16 %v288
      %v376 = vunpack.c.l.b16 %v289
      %v377 = vunpack.c.l.b16 %v290
      %v378 = vunpack.c.l.b16 %v291
      %v379 = vunpack.c.l.b16 %v292
      %v380 = vunpack.c.l.b16 %v293
      %v381 = vunpack.c.l.b16 %v294
      %v382 = vunpack.c.l.b16 %v295
      %v383 = vunpack.c.l.b16 %v296
      %v384 = vunpack.c.l.b16 %v297
      %v385 = vunpack.c.l.b16 %v298
      %v386 = vunpack.c.l.b16 %v299
      %v387 = vunpack.c.l.b16 %v300
      %v388 = vunpack.c.l.b16 %v301
      %v389 = vunpack.c.l.b16 %v302
      %v390 = vunpack.c.l.b16 %v303
      %v391 = vpack.c.b16 %v360, %v359
      %v392 = vpack.c.b16 %v362, %v361
      %v393 = vpack.c.b16 %v364, %v363
      %v394 = vpack.c.b16 %v366, %v365
      %v395 = vpack.c.b16 %v368, %v367
      %v396 = vpack.c.b16 %v370, %v369
      %v397 = vpack.c.b16 %v372, %v371
      %v398 = vpack.c.b16 %v374, %v373
      %v399 = vpack.c.b16 %v376, %v375
      %v400 = vpack.c.b16 %v378, %v377
      %v401 = vpack.c.b16 %v380, %v379
      %v402 = vpack.c.b16 %v382, %v381
      %v403 = vpack.c.b16 %v384, %v383
      %v404 = vpack.c.b16 %v386, %v385
      %v405 = vpack.c.b16 %v388, %v387
      %v406 = vpack.c.b16 %v390, %v389
      %v439 = vunpack.c.l.b16 %v304
      %v440 = vunpack.c.l.b16 %v305
      %v441 = vunpack.c.l.b16 %v306
      %v442 = vunpack.c.l.b16 %v307
      %v443 = vunpack.c.l.b16 %v308
      %v444 = vunpack.c.l.b16 %v309
      %v445 = vunpack.c.l.b16 %v310
      %v446 = vunpack.c.l.b16 %v311
      %v447 = vunpack.c.l.b16 %v312
      %v448 = vunpack.c.l.b16 %v313
      %v449 = vunpack.c.l.b16 %v314
      %v450 = vunpack.c.l.b16 %v315
      %v451 = vunpack.c.l.b16 %v316
      %v452 = vunpack.c.l.b16 %v317
      %v453 = vunpack.c.l.b16 %v318
      %v454 = vunpack.c.l.b16 %v319
      %v455 = vpack.c.b16 %v440, %v439
      %v456 = vpack.c.b16 %v442, %v441
      %v457 = vpack.c.b16 %v444, %v443
      %v458 = vpack.c.b16 %v446, %v445
      %v459 = vpack.c.b16 %v448, %v447
      %v460 = vpack.c.b16 %v450, %v449
      %v461 = vpack.c.b16 %v452, %v451
      %v462 = vpack.c.b16 %v454, %v453
      %471 = vmatprep.subr.bf16.mxu0 0
      %472 = vmatpush1.bf16.msra.mxu0 %v462
      %473 = vmatprep.subr.bf16.mxu0 0
      %474 = vmatpush1.bf16.msra.mxu0 %v461
      %475 = vmatprep.subr.bf16.mxu0 0
      %476 = vmatpush1.bf16.msra.mxu0 %v460
      %477 = vmatprep.subr.bf16.mxu0 0
      %478 = vmatpush1.bf16.msra.mxu0 %v459
      %479 = vmatprep.subr.bf16.mxu0 0
      %480 = vmatpush1.bf16.msra.mxu0 %v458
      %481 = vmatprep.subr.bf16.mxu0 0
      %482 = vmatpush1.bf16.msra.mxu0 %v457
      %483 = vmatprep.subr.bf16.mxu0 0
      %484 = vmatpush1.bf16.msra.mxu0 %v456
      %485 = vmatprep.subr.bf16.mxu0 0
      %486 = vmatpush1.bf16.msra.mxu0 %v455
      %487 = vmatprep.subr.bf16.mxu0 0
      %488 = vmatpush2.bf16.msra.mxu0 0
      %489 = vmatprep.subr.bf16.mxu0 0
      %490 = vmatpush2.bf16.msra.mxu0 0
      %491 = vmatprep.subr.bf16.mxu0 0
      %492 = vmatpush2.bf16.msra.mxu0 0
      %493 = vmatprep.subr.bf16.mxu0 0
      %494 = vmatpush2.bf16.msra.mxu0 0
      %495 = vmatprep.subr.bf16.mxu0 0
      %496 = vmatpush2.bf16.msra.mxu0 0
      %497 = vmatprep.subr.bf16.mxu0 0
      %498 = vmatpush2.bf16.msra.mxu0 0
      %499 = vmatprep.subr.bf16.mxu0 0
      %500 = vmatpush2.bf16.msra.mxu0 0
      %501 = vmatprep.subr.bf16.mxu0 0
      %502 = vmatpush2.bf16.msra.mxu0 0
      %503 = vmatprep.mubr.bf16.mxu0 0
      %504 = vmatmul.mubr.bf16.gmra.mxu0 %v391
      %v505 = vpop.f32.mrf.mxu0
      %v506 = vadd.f32 %v325, %v505
      %v507 = vpop.f32.mrf.mxu0
      %v508 = vpop.f32.mrf.mxu0
      %v509 = vadd.f32 %v325, %v508
      %v510 = vpop.f32.mrf.mxu0
      %511 = vmatprep.mubr.bf16.mxu0 0
      %512 = vmatmul.mubr.bf16.gmra.mxu0 %v392
      %v513 = vpop.f32.mrf.mxu0
      %v514 = vadd.f32 %v325, %v513
      %v515 = vpop.f32.mrf.mxu0
      %v516 = vpop.f32.mrf.mxu0
      %v517 = vadd.f32 %v325, %v516
      %v518 = vpop.f32.mrf.mxu0
      %519 = vmatprep.mubr.bf16.mxu0 0
      %520 = vmatmul.mubr.bf16.gmra.mxu0 %v393
      %v521 = vpop.f32.mrf.mxu0
      %v522 = vadd.f32 %v325, %v521
      %v523 = vpop.f32.mrf.mxu0
      %v524 = vpop.f32.mrf.mxu0
      %v525 = vadd.f32 %v325, %v524
      %v526 = vpop.f32.mrf.mxu0
      %527 = vmatprep.mubr.bf16.mxu0 0
      %528 = vmatmul.mubr.bf16.gmra.mxu0 %v394
      %v529 = vpop.f32.mrf.mxu0
      %v530 = vadd.f32 %v325, %v529
      %v531 = vpop.f32.mrf.mxu0
      %v532 = vpop.f32.mrf.mxu0
      %v533 = vadd.f32 %v325, %v532
      %v534 = vpop.f32.mrf.mxu0
      %535 = vmatprep.mubr.bf16.mxu0 0
      %536 = vmatmul.mubr.bf16.gmra.mxu0 %v395
      %v537 = vpop.f32.mrf.mxu0
      %v538 = vadd.f32 %v325, %v537
      %v539 = vpop.f32.mrf.mxu0
      %v540 = vpop.f32.mrf.mxu0
      %v541 = vadd.f32 %v325, %v540
      %v542 = vpop.f32.mrf.mxu0
      %543 = vmatprep.mubr.bf16.mxu0 0
      %544 = vmatmul.mubr.bf16.gmra.mxu0 %v396
      %v545 = vpop.f32.mrf.mxu0
      %v546 = vadd.f32 %v325, %v545
      %v547 = vpop.f32.mrf.mxu0
      %v548 = vpop.f32.mrf.mxu0
      %v549 = vadd.f32 %v325, %v548
      %v550 = vpop.f32.mrf.mxu0
      %551 = vmatprep.mubr.bf16.mxu0 0
      %552 = vmatmul.mubr.bf16.gmra.mxu0 %v397
      %v553 = vpop.f32.mrf.mxu0
      %v554 = vadd.f32 %v325, %v553
      %v555 = vpop.f32.mrf.mxu0
      %v556 = vpop.f32.mrf.mxu0
      %v557 = vadd.f32 %v325, %v556
      %v558 = vpop.f32.mrf.mxu0
      %559 = vmatprep.mubr.bf16.mxu0 0
      %560 = vmatmul.mubr.bf16.gmra.mxu0 %v398
      %v561 = vpop.f32.mrf.mxu0
      %v562 = vadd.f32 %v325, %v561
      %v563 = vpop.f32.mrf.mxu0
      %v564 = vpop.f32.mrf.mxu0
      %v565 = vadd.f32 %v325, %v564
      %v566 = vpop.f32.mrf.mxu0
      %567 = vmatprep.mubr.bf16.mxu0 0
      %568 = vmatmul.mubr.bf16.gmra.mxu0 %v399
      %v569 = vpop.f32.mrf.mxu0
      %v570 = vadd.f32 %v325, %v569
      %v571 = vpop.f32.mrf.mxu0
      %v572 = vpop.f32.mrf.mxu0
      %v573 = vadd.f32 %v325, %v572
      %v574 = vpop.f32.mrf.mxu0
      %575 = vmatprep.mubr.bf16.mxu0 0
      %576 = vmatmul.mubr.bf16.gmra.mxu0 %v400
      %v577 = vpop.f32.mrf.mxu0
      %v578 = vadd.f32 %v325, %v577
      %v579 = vpop.f32.mrf.mxu0
      %v580 = vpop.f32.mrf.mxu0
      %v581 = vadd.f32 %v325, %v580
      %v582 = vpop.f32.mrf.mxu0
      %583 = vmatprep.mubr.bf16.mxu0 0
      %584 = vmatmul.mubr.bf16.gmra.mxu0 %v401
      %v585 = vpop.f32.mrf.mxu0
      %v586 = vadd.f32 %v325, %v585
      %v587 = vpop.f32.mrf.mxu0
      %v588 = vpop.f32.mrf.mxu0
      %v589 = vadd.f32 %v325, %v588
      %v590 = vpop.f32.mrf.mxu0
      %591 = vmatprep.mubr.bf16.mxu0 0
      %592 = vmatmul.mubr.bf16.gmra.mxu0 %v402
      %v593 = vpop.f32.mrf.mxu0
      %v594 = vadd.f32 %v325, %v593
      %v595 = vpop.f32.mrf.mxu0
      %v596 = vpop.f32.mrf.mxu0
      %v597 = vadd.f32 %v325, %v596
      %v598 = vpop.f32.mrf.mxu0
      %599 = vmatprep.mubr.bf16.mxu0 0
      %600 = vmatmul.mubr.bf16.gmra.mxu0 %v403
      %v601 = vpop.f32.mrf.mxu0
      %v602 = vadd.f32 %v325, %v601
      %v603 = vpop.f32.mrf.mxu0
      %v604 = vpop.f32.mrf.mxu0
      %v605 = vadd.f32 %v325, %v604
      %v606 = vpop.f32.mrf.mxu0
      %607 = vmatprep.mubr.bf16.mxu0 0
      %608 = vmatmul.mubr.bf16.gmra.mxu0 %v404
      %v609 = vpop.f32.mrf.mxu0
      %v610 = vadd.f32 %v325, %v609
      %v611 = vpop.f32.mrf.mxu0
      %v612 = vpop.f32.mrf.mxu0
      %v613 = vadd.f32 %v325, %v612
      %v614 = vpop.f32.mrf.mxu0
      %615 = vmatprep.mubr.bf16.mxu0 0
      %616 = vmatmul.mubr.bf16.gmra.mxu0 %v405
      %v617 = vpop.f32.mrf.mxu0
      %v618 = vadd.f32 %v325, %v617
      %v619 = vpop.f32.mrf.mxu0
      %v620 = vpop.f32.mrf.mxu0
      %v621 = vadd.f32 %v325, %v620
      %v622 = vpop.f32.mrf.mxu0
      %623 = vmatprep.mubr.bf16.mxu0 0
      %624 = vmatmul.mubr.bf16.gmra.mxu0 %v406
      %v625 = vpop.f32.mrf.mxu0
      %v626 = vadd.f32 %v325, %v625
      %v627 = vpop.f32.mrf.mxu0
      %v628 = vpop.f32.mrf.mxu0
      %v629 = vadd.f32 %v325, %v628
      %v630 = vpop.f32.mrf.mxu0
      %631 = vdwg.mxu0
      %v632 = vmax.f32 %v506, 0.0
      %v633 = vmax.f32 %v509, 0.0
      %v634 = vmax.f32 %v514, 0.0
      %v635 = vmax.f32 %v517, 0.0
      %v636 = vmax.f32 %v522, 0.0
      %v637 = vmax.f32 %v525, 0.0
      %v638 = vmax.f32 %v530, 0.0
      %v639 = vmax.f32 %v533, 0.0
      %v640 = vmax.f32 %v538, 0.0
      %v641 = vmax.f32 %v541, 0.0
      %v642 = vmax.f32 %v546, 0.0
      %v643 = vmax.f32 %v549, 0.0
      %v644 = vmax.f32 %v554, 0.0
      %v645 = vmax.f32 %v557, 0.0
      %v646 = vmax.f32 %v562, 0.0
      %v647 = vmax.f32 %v565, 0.0
      %v648 = vmax.f32 %v570, 0.0
      %v649 = vmax.f32 %v573, 0.0
      %v650 = vmax.f32 %v578, 0.0
      %v651 = vmax.f32 %v581, 0.0
      %v652 = vmax.f32 %v586, 0.0
      %v653 = vmax.f32 %v589, 0.0
      %v654 = vmax.f32 %v594, 0.0
      %v655 = vmax.f32 %v597, 0.0
      %v656 = vmax.f32 %v602, 0.0
      %v657 = vmax.f32 %v605, 0.0
      %v658 = vmax.f32 %v610, 0.0
      %v659 = vmax.f32 %v613, 0.0
      %v660 = vmax.f32 %v618, 0.0
      %v661 = vmax.f32 %v621, 0.0
      %v662 = vmax.f32 %v626, 0.0
      %v663 = vmax.f32 %v629, 0.0
      %v664 = vmin.f32 %v632, 6.0
      %v665 = vmin.f32 %v633, 6.0
      %v666 = vmin.f32 %v634, 6.0
      %v667 = vmin.f32 %v635, 6.0
      %v668 = vmin.f32 %v636, 6.0
      %v669 = vmin.f32 %v637, 6.0
      %v670 = vmin.f32 %v638, 6.0
      %v671 = vmin.f32 %v639, 6.0
      %v672 = vmin.f32 %v640, 6.0
      %v673 = vmin.f32 %v641, 6.0
      %v674 = vmin.f32 %v642, 6.0
      %v675 = vmin.f32 %v643, 6.0
      %v676 = vmin.f32 %v644, 6.0
      %v677 = vmin.f32 %v645, 6.0
      %v678 = vmin.f32 %v646, 6.0
      %v679 = vmin.f32 %v647, 6.0
      %v680 = vmin.f32 %v648, 6.0
      %v681 = vmin.f32 %v649, 6.0
      %v682 = vmin.f32 %v650, 6.0
      %v683 = vmin.f32 %v651, 6.0
      %v684 = vmin.f32 %v652, 6.0
      %v685 = vmin.f32 %v653, 6.0
      %v686 = vmin.f32 %v654, 6.0
      %v687 = vmin.f32 %v655, 6.0
      %v688 = vmin.f32 %v656, 6.0
      %v689 = vmin.f32 %v657, 6.0
      %v690 = vmin.f32 %v658, 6.0
      %v691 = vmin.f32 %v659, 6.0
      %v692 = vmin.f32 %v660, 6.0
      %v693 = vmin.f32 %v661, 6.0
      %v694 = vmin.f32 %v662, 6.0
      %v695 = vmin.f32 %v663, 6.0
      %v696 = vpack.c.bf16 %v665, %v664
      %v697 = vpack.c.bf16 %v667, %v666
      %v698 = vpack.c.bf16 %v669, %v668
      %v699 = vpack.c.bf16 %v671, %v670
      %v700 = vpack.c.bf16 %v673, %v672
      %v701 = vpack.c.bf16 %v675, %v674
      %v702 = vpack.c.bf16 %v677, %v676
      %v703 = vpack.c.bf16 %v679, %v678
      %v704 = vpack.c.bf16 %v681, %v680
      %v705 = vpack.c.bf16 %v683, %v682
      %v706 = vpack.c.bf16 %v685, %v684
      %v707 = vpack.c.bf16 %v687, %v686
      %v708 = vpack.c.bf16 %v689, %v688
      %v709 = vpack.c.bf16 %v691, %v690
      %v710 = vpack.c.bf16 %v693, %v692
      %v711 = vpack.c.bf16 %v695, %v694
      %s712 = scalar_lea.vmem %s1, 64
      %v713 = vld [vmem:[%s712] sm:$0xf]
      %v714 = vld [vmem:[%s712 + $0x4] sm:$0xf]
      %v715 = vld [vmem:[%s712 + $0x8] sm:$0xf]
      %v716 = vld [vmem:[%s712 + $0xc] sm:$0xf]
      %v717 = vld [vmem:[%s712 + $0x10] sm:$0xf]
      %v718 = vld [vmem:[%s712 + $0x14] sm:$0xf]
      %v719 = vld [vmem:[%s712 + $0x18] sm:$0xf]
      %v720 = vld [vmem:[%s712 + $0x1c] sm:$0xf]
      %v721 = vld [vmem:[%s712 + $0x20] sm:$0xf]
      %v722 = vld [vmem:[%s712 + $0x24] sm:$0xf]
      %v723 = vld [vmem:[%s712 + $0x28] sm:$0xf]
      %v724 = vld [vmem:[%s712 + $0x2c] sm:$0xf]
      %v725 = vld [vmem:[%s712 + $0x30] sm:$0xf]
      %v726 = vld [vmem:[%s712 + $0x34] sm:$0xf]
      %v727 = vld [vmem:[%s712 + $0x38] sm:$0xf]
      %v728 = vld [vmem:[%s712 + $0x3c] sm:$0xf]
      %s729 = scalar_lea.vmem %s2, 1
      %v730 = vld [vmem:[%s729] sm:$0x1]
      %v732 = vlaneseq
      %v733 = vshrl.u32 %v732, 7
      %v734 = vsub.s32 0, %v733
      %v735 = vrot.slane %v730, %v734
      %v753 = vunpack.c.l.b16 %v713
      %v754 = vunpack.c.l.b16 %v714
      %v755 = vunpack.c.l.b16 %v715
      %v756 = vunpack.c.l.b16 %v716
      %v757 = vunpack.c.l.b16 %v717
      %v758 = vunpack.c.l.b16 %v718
      %v759 = vunpack.c.l.b16 %v719
      %v760 = vunpack.c.l.b16 %v720
      %v761 = vunpack.c.l.b16 %v721
      %v762 = vunpack.c.l.b16 %v722
      %v763 = vunpack.c.l.b16 %v723
      %v764 = vunpack.c.l.b16 %v724
      %v765 = vunpack.c.l.b16 %v725
      %v766 = vunpack.c.l.b16 %v726
      %v767 = vunpack.c.l.b16 %v727
      %v768 = vunpack.c.l.b16 %v728
      %v769 = vpack.c.b16 %v754, %v753
      %v770 = vpack.c.b16 %v756, %v755
      %v771 = vpack.c.b16 %v758, %v757
      %v772 = vpack.c.b16 %v760, %v759
      %v773 = vpack.c.b16 %v762, %v761
      %v774 = vpack.c.b16 %v764, %v763
      %v775 = vpack.c.b16 %v766, %v765
      %v776 = vpack.c.b16 %v768, %v767
      %785 = vmatprep.subr.bf16.mxu0 0
      %786 = vmatpush1.bf16.msra.mxu0 %v776
      %787 = vmatprep.subr.bf16.mxu0 0
      %788 = vmatpush1.bf16.msra.mxu0 %v775
      %789 = vmatprep.subr.bf16.mxu0 0
      %790 = vmatpush1.bf16.msra.mxu0 %v774
      %791 = vmatprep.subr.bf16.mxu0 0
      %792 = vmatpush1.bf16.msra.mxu0 %v773
      %793 = vmatprep.subr.bf16.mxu0 0
      %794 = vmatpush1.bf16.msra.mxu0 %v772
      %795 = vmatprep.subr.bf16.mxu0 0
      %796 = vmatpush1.bf16.msra.mxu0 %v771
      %797 = vmatprep.subr.bf16.mxu0 0
      %798 = vmatpush1.bf16.msra.mxu0 %v770
      %799 = vmatprep.subr.bf16.mxu0 0
      %800 = vmatpush1.bf16.msra.mxu0 %v769
      %801 = vmatprep.subr.bf16.mxu0 0
      %802 = vmatpush2.bf16.msra.mxu0 0
      %803 = vmatprep.subr.bf16.mxu0 0
      %804 = vmatpush2.bf16.msra.mxu0 0
      %805 = vmatprep.subr.bf16.mxu0 0
      %806 = vmatpush2.bf16.msra.mxu0 0
      %807 = vmatprep.subr.bf16.mxu0 0
      %808 = vmatpush2.bf16.msra.mxu0 0
      %809 = vmatprep.subr.bf16.mxu0 0
      %810 = vmatpush2.bf16.msra.mxu0 0
      %811 = vmatprep.subr.bf16.mxu0 0
      %812 = vmatpush2.bf16.msra.mxu0 0
      %813 = vmatprep.subr.bf16.mxu0 0
      %814 = vmatpush2.bf16.msra.mxu0 0
      %815 = vmatprep.subr.bf16.mxu0 0
      %816 = vmatpush2.bf16.msra.mxu0 0
      %817 = vmatprep.mubr.bf16.mxu0 0
      %818 = vmatmul.mubr.bf16.gmra.mxu0 %v696
      %v819 = vpop.f32.mrf.mxu0
      %v820 = vadd.f32 %v735, %v819
      %v821 = vpop.f32.mrf.mxu0
      %v822 = vpop.f32.mrf.mxu0
      %v823 = vadd.f32 %v735, %v822
      %v824 = vpop.f32.mrf.mxu0
      %825 = vmatprep.mubr.bf16.mxu0 0
      %826 = vmatmul.mubr.bf16.gmra.mxu0 %v697
      %v827 = vpop.f32.mrf.mxu0
      %v828 = vadd.f32 %v735, %v827
      %v829 = vpop.f32.mrf.mxu0
      %v830 = vpop.f32.mrf.mxu0
      %v831 = vadd.f32 %v735, %v830
      %v832 = vpop.f32.mrf.mxu0
      %833 = vmatprep.mubr.bf16.mxu0 0
      %834 = vmatmul.mubr.bf16.gmra.mxu0 %v698
      %v835 = vpop.f32.mrf.mxu0
      %v836 = vadd.f32 %v735, %v835
      %v837 = vpop.f32.mrf.mxu0
      %v838 = vpop.f32.mrf.mxu0
      %v839 = vadd.f32 %v735, %v838
      %v840 = vpop.f32.mrf.mxu0
      %841 = vmatprep.mubr.bf16.mxu0 0
      %842 = vmatmul.mubr.bf16.gmra.mxu0 %v699
      %v843 = vpop.f32.mrf.mxu0
      %v844 = vadd.f32 %v735, %v843
      %v845 = vpop.f32.mrf.mxu0
      %v846 = vpop.f32.mrf.mxu0
      %v847 = vadd.f32 %v735, %v846
      %v848 = vpop.f32.mrf.mxu0
      %849 = vmatprep.mubr.bf16.mxu0 0
      %850 = vmatmul.mubr.bf16.gmra.mxu0 %v700
      %v851 = vpop.f32.mrf.mxu0
      %v852 = vadd.f32 %v735, %v851
      %v853 = vpop.f32.mrf.mxu0
      %v854 = vpop.f32.mrf.mxu0
      %v855 = vadd.f32 %v735, %v854
      %v856 = vpop.f32.mrf.mxu0
      %857 = vmatprep.mubr.bf16.mxu0 0
      %858 = vmatmul.mubr.bf16.gmra.mxu0 %v701
      %v859 = vpop.f32.mrf.mxu0
      %v860 = vadd.f32 %v735, %v859
      %v861 = vpop.f32.mrf.mxu0
      %v862 = vpop.f32.mrf.mxu0
      %v863 = vadd.f32 %v735, %v862
      %v864 = vpop.f32.mrf.mxu0
      %865 = vmatprep.mubr.bf16.mxu0 0
      %866 = vmatmul.mubr.bf16.gmra.mxu0 %v702
      %v867 = vpop.f32.mrf.mxu0
      %v868 = vadd.f32 %v735, %v867
      %v869 = vpop.f32.mrf.mxu0
      %v870 = vpop.f32.mrf.mxu0
      %v871 = vadd.f32 %v735, %v870
      %v872 = vpop.f32.mrf.mxu0
      %873 = vmatprep.mubr.bf16.mxu0 0
      %874 = vmatmul.mubr.bf16.gmra.mxu0 %v703
      %v875 = vpop.f32.mrf.mxu0
      %v876 = vadd.f32 %v735, %v875
      %v877 = vpop.f32.mrf.mxu0
      %v878 = vpop.f32.mrf.mxu0
      %v879 = vadd.f32 %v735, %v878
      %v880 = vpop.f32.mrf.mxu0
      %881 = vmatprep.mubr.bf16.mxu0 0
      %882 = vmatmul.mubr.bf16.gmra.mxu0 %v704
      %v883 = vpop.f32.mrf.mxu0
      %v884 = vadd.f32 %v735, %v883
      %v885 = vpop.f32.mrf.mxu0
      %v886 = vpop.f32.mrf.mxu0
      %v887 = vadd.f32 %v735, %v886
      %v888 = vpop.f32.mrf.mxu0
      %889 = vmatprep.mubr.bf16.mxu0 0
      %890 = vmatmul.mubr.bf16.gmra.mxu0 %v705
      %v891 = vpop.f32.mrf.mxu0
      %v892 = vadd.f32 %v735, %v891
      %v893 = vpop.f32.mrf.mxu0
      %v894 = vpop.f32.mrf.mxu0
      %v895 = vadd.f32 %v735, %v894
      %v896 = vpop.f32.mrf.mxu0
      %897 = vmatprep.mubr.bf16.mxu0 0
      %898 = vmatmul.mubr.bf16.gmra.mxu0 %v706
      %v899 = vpop.f32.mrf.mxu0
      %v900 = vadd.f32 %v735, %v899
      %v901 = vpop.f32.mrf.mxu0
      %v902 = vpop.f32.mrf.mxu0
      %v903 = vadd.f32 %v735, %v902
      %v904 = vpop.f32.mrf.mxu0
      %905 = vmatprep.mubr.bf16.mxu0 0
      %906 = vmatmul.mubr.bf16.gmra.mxu0 %v707
      %v907 = vpop.f32.mrf.mxu0
      %v908 = vadd.f32 %v735, %v907
      %v909 = vpop.f32.mrf.mxu0
      %v910 = vpop.f32.mrf.mxu0
      %v911 = vadd.f32 %v735, %v910
      %v912 = vpop.f32.mrf.mxu0
      %913 = vmatprep.mubr.bf16.mxu0 0
      %914 = vmatmul.mubr.bf16.gmra.mxu0 %v708
      %v915 = vpop.f32.mrf.mxu0
      %v916 = vadd.f32 %v735, %v915
      %v917 = vpop.f32.mrf.mxu0
      %v918 = vpop.f32.mrf.mxu0
      %v919 = vadd.f32 %v735, %v918
      %v920 = vpop.f32.mrf.mxu0
      %921 = vmatprep.mubr.bf16.mxu0 0
      %922 = vmatmul.mubr.bf16.gmra.mxu0 %v709
      %v923 = vpop.f32.mrf.mxu0
      %v924 = vadd.f32 %v735, %v923
      %v925 = vpop.f32.mrf.mxu0
      %v926 = vpop.f32.mrf.mxu0
      %v927 = vadd.f32 %v735, %v926
      %v928 = vpop.f32.mrf.mxu0
      %929 = vmatprep.mubr.bf16.mxu0 0
      %930 = vmatmul.mubr.bf16.gmra.mxu0 %v710
      %v931 = vpop.f32.mrf.mxu0
      %v932 = vadd.f32 %v735, %v931
      %v933 = vpop.f32.mrf.mxu0
      %v934 = vpop.f32.mrf.mxu0
      %v935 = vadd.f32 %v735, %v934
      %v936 = vpop.f32.mrf.mxu0
      %937 = vmatprep.mubr.bf16.mxu0 0
      %938 = vmatmul.mubr.bf16.gmra.mxu0 %v711
      %v939 = vpop.f32.mrf.mxu0
      %v940 = vadd.f32 %v735, %v939
      %v941 = vpop.f32.mrf.mxu0
      %v942 = vpop.f32.mrf.mxu0
      %v943 = vadd.f32 %v735, %v942
      %v944 = vpop.f32.mrf.mxu0
      %945 = vdwg.mxu0
      %v946 = vmax.f32 %v820, 0.0
      %v947 = vmax.f32 %v823, 0.0
      %v948 = vmax.f32 %v828, 0.0
      %v949 = vmax.f32 %v831, 0.0
      %v950 = vmax.f32 %v836, 0.0
      %v951 = vmax.f32 %v839, 0.0
      %v952 = vmax.f32 %v844, 0.0
      %v953 = vmax.f32 %v847, 0.0
      %v954 = vmax.f32 %v852, 0.0
      %v955 = vmax.f32 %v855, 0.0
      %v956 = vmax.f32 %v860, 0.0
      %v957 = vmax.f32 %v863, 0.0
      %v958 = vmax.f32 %v868, 0.0
      %v959 = vmax.f32 %v871, 0.0
      %v960 = vmax.f32 %v876, 0.0
      %v961 = vmax.f32 %v879, 0.0
      %v962 = vmax.f32 %v884, 0.0
      %v963 = vmax.f32 %v887, 0.0
      %v964 = vmax.f32 %v892, 0.0
      %v965 = vmax.f32 %v895, 0.0
      %v966 = vmax.f32 %v900, 0.0
      %v967 = vmax.f32 %v903, 0.0
      %v968 = vmax.f32 %v908, 0.0
      %v969 = vmax.f32 %v911, 0.0
      %v970 = vmax.f32 %v916, 0.0
      %v971 = vmax.f32 %v919, 0.0
      %v972 = vmax.f32 %v924, 0.0
      %v973 = vmax.f32 %v927, 0.0
      %v974 = vmax.f32 %v932, 0.0
      %v975 = vmax.f32 %v935, 0.0
      %v976 = vmax.f32 %v940, 0.0
      %v977 = vmax.f32 %v943, 0.0
      %v978 = vmin.f32 %v946, 6.0
      %v979 = vmin.f32 %v947, 6.0
      %v980 = vmin.f32 %v948, 6.0
      %v981 = vmin.f32 %v949, 6.0
      %v982 = vmin.f32 %v950, 6.0
      %v983 = vmin.f32 %v951, 6.0
      %v984 = vmin.f32 %v952, 6.0
      %v985 = vmin.f32 %v953, 6.0
      %v986 = vmin.f32 %v954, 6.0
      %v987 = vmin.f32 %v955, 6.0
      %v988 = vmin.f32 %v956, 6.0
      %v989 = vmin.f32 %v957, 6.0
      %v990 = vmin.f32 %v958, 6.0
      %v991 = vmin.f32 %v959, 6.0
      %v992 = vmin.f32 %v960, 6.0
      %v993 = vmin.f32 %v961, 6.0
      %v994 = vmin.f32 %v962, 6.0
      %v995 = vmin.f32 %v963, 6.0
      %v996 = vmin.f32 %v964, 6.0
      %v997 = vmin.f32 %v965, 6.0
      %v998 = vmin.f32 %v966, 6.0
      %v999 = vmin.f32 %v967, 6.0
      %v1000 = vmin.f32 %v968, 6.0
      %v1001 = vmin.f32 %v969, 6.0
      %v1002 = vmin.f32 %v970, 6.0
      %v1003 = vmin.f32 %v971, 6.0
      %v1004 = vmin.f32 %v972, 6.0
      %v1005 = vmin.f32 %v973, 6.0
      %v1006 = vmin.f32 %v974, 6.0
      %v1007 = vmin.f32 %v975, 6.0
      %v1008 = vmin.f32 %v976, 6.0
      %v1009 = vmin.f32 %v977, 6.0
      %v1010 = vpack.c.bf16 %v979, %v978
      %v1011 = vpack.c.bf16 %v981, %v980
      %v1012 = vpack.c.bf16 %v983, %v982
      %v1013 = vpack.c.bf16 %v985, %v984
      %v1014 = vpack.c.bf16 %v987, %v986
      %v1015 = vpack.c.bf16 %v989, %v988
      %v1016 = vpack.c.bf16 %v991, %v990
      %v1017 = vpack.c.bf16 %v993, %v992
      %v1018 = vpack.c.bf16 %v995, %v994
      %v1019 = vpack.c.bf16 %v997, %v996
      %v1020 = vpack.c.bf16 %v999, %v998
      %v1021 = vpack.c.bf16 %v1001, %v1000
      %v1022 = vpack.c.bf16 %v1003, %v1002
      %v1023 = vpack.c.bf16 %v1005, %v1004
      %v1024 = vpack.c.bf16 %v1007, %v1006
      %v1025 = vpack.c.bf16 %v1009, %v1008
      %v1042 = vunpack.c.l.b16 %v1010
      %v1043 = vunpack.c.h.b16 %v1010
      %v1044 = vunpack.c.l.b16 %v1011
      %v1045 = vunpack.c.h.b16 %v1011
      %v1046 = vunpack.c.l.b16 %v1012
      %v1047 = vunpack.c.h.b16 %v1012
      %v1048 = vunpack.c.l.b16 %v1013
      %v1049 = vunpack.c.h.b16 %v1013
      %v1050 = vunpack.c.l.b16 %v1014
      %v1051 = vunpack.c.h.b16 %v1014
      %v1052 = vunpack.c.l.b16 %v1015
      %v1053 = vunpack.c.h.b16 %v1015
      %v1054 = vunpack.c.l.b16 %v1016
      %v1055 = vunpack.c.h.b16 %v1016
      %v1056 = vunpack.c.l.b16 %v1017
      %v1057 = vunpack.c.h.b16 %v1017
      %v1058 = vunpack.c.l.b16 %v1018
      %v1059 = vunpack.c.h.b16 %v1018
      %v1060 = vunpack.c.l.b16 %v1019
      %v1061 = vunpack.c.h.b16 %v1019
      %v1062 = vunpack.c.l.b16 %v1020
      %v1063 = vunpack.c.h.b16 %v1020
      %v1064 = vunpack.c.l.b16 %v1021
      %v1065 = vunpack.c.h.b16 %v1021
      %v1066 = vunpack.c.l.b16 %v1022
      %v1067 = vunpack.c.h.b16 %v1022
      %v1068 = vunpack.c.l.b16 %v1023
      %v1069 = vunpack.c.h.b16 %v1023
      %v1070 = vunpack.c.l.b16 %v1024
      %v1071 = vunpack.c.h.b16 %v1024
      %v1072 = vunpack.c.l.b16 %v1025
      %v1073 = vunpack.c.h.b16 %v1025
      %v1074 = vpack.c.b16 %v1042, %v1042
      %v1075 = vpack.c.b16 %v1043, %v1043
      %v1076 = vpack.c.b16 %v1044, %v1044
      %v1077 = vpack.c.b16 %v1045, %v1045
      %v1078 = vpack.c.b16 %v1046, %v1046
      %v1079 = vpack.c.b16 %v1047, %v1047
      %v1080 = vpack.c.b16 %v1048, %v1048
      %v1081 = vpack.c.b16 %v1049, %v1049
      %v1082 = vpack.c.b16 %v1050, %v1050
      %v1083 = vpack.c.b16 %v1051, %v1051
      %v1084 = vpack.c.b16 %v1052, %v1052
      %v1085 = vpack.c.b16 %v1053, %v1053
      %v1086 = vpack.c.b16 %v1054, %v1054
      %v1087 = vpack.c.b16 %v1055, %v1055
      %v1088 = vpack.c.b16 %v1056, %v1056
      %v1089 = vpack.c.b16 %v1057, %v1057
      %v1090 = vpack.c.b16 %v1058, %v1058
      %v1091 = vpack.c.b16 %v1059, %v1059
      %v1092 = vpack.c.b16 %v1060, %v1060
      %v1093 = vpack.c.b16 %v1061, %v1061
      %v1094 = vpack.c.b16 %v1062, %v1062
      %v1095 = vpack.c.b16 %v1063, %v1063
      %v1096 = vpack.c.b16 %v1064, %v1064
      %v1097 = vpack.c.b16 %v1065, %v1065
      %v1098 = vpack.c.b16 %v1066, %v1066
      %v1099 = vpack.c.b16 %v1067, %v1067
      %v1100 = vpack.c.b16 %v1068, %v1068
      %v1101 = vpack.c.b16 %v1069, %v1069
      %v1102 = vpack.c.b16 %v1070, %v1070
      %v1103 = vpack.c.b16 %v1071, %v1071
      %v1104 = vpack.c.b16 %v1072, %v1072
      %v1105 = vpack.c.b16 %v1073, %v1073
      %vm1138 = vcmask 60416
      %1139 = vst.msk [vmem:[%s172] sm:$0xf] %vm1138, %v1074
      %1140 = vst.msk [vmem:[%s172 + $0x4] sm:$0xf] %vm1138, %v1075
      %1141 = vst.msk [vmem:[%s172 + $0x8] sm:$0xf] %vm1138, %v1076
      %1142 = vst.msk [vmem:[%s172 + $0xc] sm:$0xf] %vm1138, %v1077
      %1143 = vst.msk [vmem:[%s172 + $0x10] sm:$0xf] %vm1138, %v1078
      %1144 = vst.msk [vmem:[%s172 + $0x14] sm:$0xf] %vm1138, %v1079
      %1145 = vst.msk [vmem:[%s172 + $0x18] sm:$0xf] %vm1138, %v1080
      %1146 = vst.msk [vmem:[%s172 + $0x1c] sm:$0xf] %vm1138, %v1081
      %1147 = vst.msk [vmem:[%s172 + $0x20] sm:$0xf] %vm1138, %v1082
      %1148 = vst.msk [vmem:[%s172 + $0x24] sm:$0xf] %vm1138, %v1083
      %1149 = vst.msk [vmem:[%s172 + $0x28] sm:$0xf] %vm1138, %v1084
      %1150 = vst.msk [vmem:[%s172 + $0x2c] sm:$0xf] %vm1138, %v1085
      %1151 = vst.msk [vmem:[%s172 + $0x30] sm:$0xf] %vm1138, %v1086
      %1152 = vst.msk [vmem:[%s172 + $0x34] sm:$0xf] %vm1138, %v1087
      %1153 = vst.msk [vmem:[%s172 + $0x38] sm:$0xf] %vm1138, %v1088
      %1154 = vst.msk [vmem:[%s172 + $0x3c] sm:$0xf] %vm1138, %v1089
      %1155 = vst.msk [vmem:[%s172 + $0x40] sm:$0xf] %vm1138, %v1090
      %1156 = vst.msk [vmem:[%s172 + $0x44] sm:$0xf] %vm1138, %v1091
      %1157 = vst.msk [vmem:[%s172 + $0x48] sm:$0xf] %vm1138, %v1092
      %1158 = vst.msk [vmem:[%s172 + $0x4c] sm:$0xf] %vm1138, %v1093
      %1159 = vst.msk [vmem:[%s172 + $0x50] sm:$0xf] %vm1138, %v1094
      %1160 = vst.msk [vmem:[%s172 + $0x54] sm:$0xf] %vm1138, %v1095
      %1161 = vst.msk [vmem:[%s172 + $0x58] sm:$0xf] %vm1138, %v1096
      %1162 = vst.msk [vmem:[%s172 + $0x5c] sm:$0xf] %vm1138, %v1097
      %1163 = vst.msk [vmem:[%s172 + $0x60] sm:$0xf] %vm1138, %v1098
      %1164 = vst.msk [vmem:[%s172 + $0x64] sm:$0xf] %vm1138, %v1099
      %1165 = vst.msk [vmem:[%s172 + $0x68] sm:$0xf] %vm1138, %v1100
      %1166 = vst.msk [vmem:[%s172 + $0x6c] sm:$0xf] %vm1138, %v1101
      %1167 = vst.msk [vmem:[%s172 + $0x70] sm:$0xf] %vm1138, %v1102
      %1168 = vst.msk [vmem:[%s172 + $0x74] sm:$0xf] %vm1138, %v1103
      %1169 = vst.msk [vmem:[%s172 + $0x78] sm:$0xf] %vm1138, %v1104
      %1170 = vst.msk [vmem:[%s172 + $0x7c] sm:$0xf] %vm1138, %v1105
      %s1171 = smul.u32 32, %s14
      %p1172 = scmp.lt.s32.totalorder %s1171, 63
      %s1173 = scalar_select %p1172, %s1171, 63
      %s1174 = smul.addr %s1173, 4
      %s1175 = scalar_lea.vmem %s3, %s1174
      // Predicated region
      $region33: #{_lambda_.1} parent=31 // pred_check
        %p1176 = pneg %p100
      $region34: #{_lambda_.1} parent=31 // pred_check_branch
        %1178 = sbr.rel (%p1176) target = $region36
      $region35: #{_lambda_.1} parent=31 // pred_region
        %s1179 = smul.u32 32, %s14
      $region36: #{_lambda_.1} parent=31 // pred_fallthru
        _
    $region32: #{_lambda_.1} parent=5 // pred_fallthru
      _
    %p1180 = scmp.le.s32.totalorder 2, %s9
    // Predicated region
    $region37: #{_lambda_.1} parent=5 // pred_check
      %p1181 = pneg %p1180
    $region38: #{_lambda_.1} parent=5 // pred_check_branch
      %1183 = sbr.rel (%p1181) target = $region40
    $region39: #{_lambda_.1} parent=5 // pred_region
      %s1184 = ssub.s32 %s9, 2
      // Predicated region
      $region41: #{_lambda_.1} parent=39 // pred_check
        %p1185 = pneg %p106
      $region42: #{_lambda_.1} parent=39 // pred_check_branch
        %1187 = sbr.rel (%p1185) target = $region44
      $region43: #{_lambda_.1} parent=39 // pred_region
        %s1188 = smul.u32 32, %s15
        %p1189 = scmp.lt.s32.totalorder %s1188, 63
        %s1190 = scalar_select %p1189, %s1188, 63
        %s1191 = smul.addr %s1190, 4
        %s1192 = scalar_lea.vmem %s3, %s1191
      $region44: #{_lambda_.1} parent=39 // pred_fallthru
        _
    $region40: #{_lambda_.1} parent=5 // pred_fallthru
      _
  $region6: #{_lambda_.1} parent=0 // loop_footer
    %s13 = sadd.s32 1, %s9
  $region7: #{_lambda_.1} parent=0 // loop_footer_branch
    %8 = sbr.rel target = $region3
  $region8: #{_lambda_.1} parent=0 // loop_exit
    _

</llo_original>
